<compile_context>
chip_gen: v5e
topology: v5e:2x2
jax: 0.10.0
libtpu: 0.0.40
codegen_flags: <defaults>
</compile_context>

<pallas_src>
import functools

import jax
import jax.numpy as jnp
from jax.experimental import pallas as pl
from jax.experimental.pallas import tpu as pltpu


# ---------------------------------------------------------------------------
# Kernels
# ---------------------------------------------------------------------------
def _ffn_kernel_resident(x_ref, w1_ref, b1_ref, w2_ref, b2_ref, o_ref, *,
                         negative_slope: float):
    """Weights fully VMEM-resident (tf == F): one row tile per grid step.

    x_ref : (tm, E)   w1_ref: (E, F)   b1_ref: (1, F) f32
    w2_ref: (F, E)    b2_ref: (1, E) f32   o_ref: (tm, E)
    """
    h = jnp.dot(x_ref[...], w1_ref[...], preferred_element_type=jnp.float32)
    h = h + b1_ref[...]
    h = jnp.maximum(h, negative_slope * h)              # LeakyReLU (single VPU max)
    out = jnp.dot(h.astype(w2_ref.dtype), w2_ref[...],
                  preferred_element_type=jnp.float32)
    o_ref[...] = (out + b2_ref[...]).astype(o_ref.dtype)


def _ffn_kernel_split(x_ref, w1_ref, b1_ref, w2_ref, b2_ref, o_ref, acc_ref, *,
                      negative_slope: float):
    """ff dimension tiled: lin2 partial products accumulated across the j axis.

    x_ref : (tm, E)   w1_ref: (E, tf)  b1_ref: (1, tf) f32
    w2_ref: (tf, E)   b2_ref: (1, E) f32   o_ref: (tm, E)
    acc_ref: (tm, E) f32 scratch, resident across the j (ff) axis.
    """
    j = pl.program_id(1)

    @pl.when(j == 0)
    def _():
        acc_ref[...] = jnp.zeros_like(acc_ref)

    h = jnp.dot(x_ref[...], w1_ref[...], preferred_element_type=jnp.float32)
    h = h + b1_ref[...]
    h = jnp.maximum(h, negative_slope * h)              # LeakyReLU
    acc_ref[...] += jnp.dot(h.astype(w2_ref.dtype), w2_ref[...],
                            preferred_element_type=jnp.float32)

    @pl.when(j == pl.num_programs(1) - 1)
    def _():
        o_ref[...] = (acc_ref[...] + b2_ref[...]).astype(o_ref.dtype)


# ---------------------------------------------------------------------------
# Tiling helpers
# ---------------------------------------------------------------------------
def _round_up(x: int, m: int) -> int:
    return ((x + m - 1) // m) * m


def _cdiv(a: int, b: int) -> int:
    return -(-a // b)


def _vmem_budget_bytes() -> int:
    """Per-chip VMEM budget with compiler headroom (safe default = v7x 64 MiB)."""
    cap = 64 * 1024 * 1024
    try:
        cap = int(getattr(pltpu.get_tpu_info(), "vmem_capacity_bytes", cap)) or cap
    except Exception:
        pass
    return max(int(cap * 0.70), 24 * 1024 * 1024)


def _balanced_row_tile(M: int, target: int, align: int) -> int:
    """Largest multiple-of-`align` row tile <= ~target that balances row tiles."""
    M = max(M, 1)
    target = max(align, _round_up(min(target, M), align))
    n_tiles = _cdiv(M, target)
    return _round_up(_cdiv(M, n_tiles), align)


def _ff_tile_candidates(F: int):
    cands = [F]
    for c in (4096, 2048, 1024, 512, 256, 128):
        if c < F and F % c == 0:
            cands.append(c)
    return cands  # descending


def _plan_tiles(M, E, F, in_sz, w_sz, out_sz, row_align, budget, row_tile,
                weight_buffers):
    """Pick (mode, tm, tf) so the VMEM working set fits `budget` bytes."""
    bias_bytes = 2 * 8 * (F + E) * 4          # (1, F)/(1, E) f32, sublane-padded

    def resident_bytes(tm):
        return (2 * tm * E * in_sz                      # x block (double-buffered)
                + 2 * (E * F + F * E) * w_sz            # W1 + W2 (conservative 2 bufs)
                + 2 * tm * E * out_sz                   # out block
                + tm * F * (4 + w_sz)                   # f32 hidden + bf16 cast copy
                + bias_bytes)

    def split_bytes(tm, tf):
        wb = max(2, int(weight_buffers))
        return (2 * tm * E * in_sz
                + wb * (E * tf + tf * E) * w_sz         # streamed weight slices
                + 2 * tm * E * out_sz
                + tm * E * 4                            # f32 accumulator scratch
                + tm * tf * (4 + w_sz)                  # hidden temp
                + bias_bytes)

    # --- 1) weight-resident path (tf = F): weights DMA'd from HBM exactly once.
    tm = _balanced_row_tile(M, row_tile, row_align)
    while tm > row_align and resident_bytes(tm) > budget:
        tm = _balanced_row_tile(M, max(row_align, tm // 2), row_align)
    if resident_bytes(tm) <= budget:
        # v7x megacore: keep >= 2 tiles on the "parallel" row axis when M allows.
        if _cdiv(M, tm) < 2 and M >= 2 * row_align:
            tm = _balanced_row_tile(M, _round_up(_cdiv(M, 2), row_align), row_align)
        return "resident", tm, F

    # --- 2) split the ff axis; maximize tm first (weight traffic ∝ num row tiles).
    for tm_target in (1024, 512, 256, 128, 64, 32, 16, 8):
        if tm_target < row_align or tm_target > max(M, row_align):
            continue
        tm = _balanced_row_tile(M, tm_target, row_align)
        for tf in _ff_tile_candidates(F):
            if split_bytes(tm, tf) <= budget:
                return "split", tm, tf

    # --- 3) last resort: smallest tiles.
    return "split", _balanced_row_tile(M, row_align, row_align), _ff_tile_candidates(F)[-1]


# ---------------------------------------------------------------------------
# Wrapper
# ---------------------------------------------------------------------------
def feed_forward(x: jnp.ndarray,
                 w1: jnp.ndarray, b1: jnp.ndarray,
                 w2: jnp.ndarray, b2: jnp.ndarray,
                 *,
                 negative_slope: float = 0.01,
                 use_bf16_matmul: bool = True,
                 row_tile: int = 512,
                 weight_buffers: int = 2) -> jnp.ndarray:
    """x: (..., E).  w1: (E, F), b1: (F,), w2: (F, E), b2: (E,).  Returns (..., E)."""
    orig_shape = x.shape
    E = x.shape[-1]
    F = w1.shape[1]
    assert w1.shape == (E, F) and w2.shape == (F, E)
    assert b1.shape == (F,) and b2.shape == (E,)

    out_dtype = x.dtype
    compute_dtype = (jnp.bfloat16 if (use_bf16_matmul and x.dtype == jnp.float32)
                     else x.dtype)

    # Flatten leading dims -> lane-dense 2-D (M, E); cast MXU operands.
    x2 = x.reshape(-1, E).astype(compute_dtype)
    w1c = w1.astype(compute_dtype)
    w2c = w2.astype(compute_dtype)
    b1_2d = b1.astype(jnp.float32).reshape(1, F)
    b2_2d = b2.astype(jnp.float32).reshape(1, E)

    M = x2.shape[0]
    in_sz = jnp.dtype(compute_dtype).itemsize
    w_sz = in_sz
    out_sz = jnp.dtype(out_dtype).itemsize
    row_align = 8 if in_sz >= 4 else (16 if in_sz == 2 else 32)

    budget = _vmem_budget_bytes()
    mode, tm, tf = _plan_tiles(M, E, F, in_sz, w_sz, out_sz, row_align,
                               budget, row_tile, weight_buffers)

    n_row = _cdiv(M, tm)
    Mp = n_row * tm
    if Mp != M:
        x2 = jnp.pad(x2, ((0, Mp - M), (0, 0)))
    n_ff = F // tf

    # Accurate HBM traffic: weights are re-streamed per row tile only when F is split.
    weight_passes = n_row if n_ff > 1 else 1
    cost = pl.CostEstimate(
        flops=4 * Mp * E * F,                           # two (M,E)x(E,F)-sized matmuls
        transcendentals=0,
        bytes_accessed=(Mp * E * in_sz + Mp * E * out_sz
                        + weight_passes * 2 * E * F * w_sz
                        + (F + E) * 4),
    )
    compiler_params = pltpu.CompilerParams(
        dimension_semantics=(("parallel",) if mode == "resident"
                             else ("parallel", "arbitrary")),
        vmem_limit_bytes=int(budget),
    )

    if mode == "resident":
        kernel = functools.partial(_ffn_kernel_resident,
                                   negative_slope=negative_slope)
        grid_spec = pltpu.PrefetchScalarGridSpec(
            num_scalar_prefetch=0,
            grid=(n_row,),
            in_specs=[
                pl.BlockSpec((tm, E), lambda i: (i, 0)),   # x rows
                pl.BlockSpec((E, F), lambda i: (0, 0)),    # W1 (VMEM resident)
                pl.BlockSpec((1, F), lambda i: (0, 0)),    # b1
                pl.BlockSpec((F, E), lambda i: (0, 0)),    # W2 (VMEM resident)
                pl.BlockSpec((1, E), lambda i: (0, 0)),    # b2
            ],
            out_specs=pl.BlockSpec((tm, E), lambda i: (i, 0)),
            scratch_shapes=(),
        )
    else:
        kernel = functools.partial(_ffn_kernel_split,
                                   negative_slope=negative_slope)
        w_kwargs = {}
        if weight_buffers and int(weight_buffers) != 2:
            # Deeper weight pipelining (v5e knob); the VMEM budget accounted for it.
            w_kwargs = dict(pipeline_mode=pl.Buffered(int(weight_buffers)))
        grid_spec = pltpu.PrefetchScalarGridSpec(
            num_scalar_prefetch=0,
            grid=(n_row, n_ff),
            in_specs=[
                pl.BlockSpec((tm, E), lambda i, j: (i, 0)),            # x rows
                pl.BlockSpec((E, tf), lambda i, j: (0, j), **w_kwargs),  # W1 slice
                pl.BlockSpec((1, tf), lambda i, j: (0, j)),            # b1 slice
                pl.BlockSpec((tf, E), lambda i, j: (j, 0), **w_kwargs),  # W2 slice
                pl.BlockSpec((1, E), lambda i, j: (0, 0)),             # b2
            ],
            out_specs=pl.BlockSpec((tm, E), lambda i, j: (i, 0)),
            scratch_shapes=[pltpu.VMEM((tm, E), jnp.float32)],
        )

    out = pl.pallas_call(
        kernel,
        out_shape=jax.ShapeDtypeStruct((Mp, E), out_dtype),
        grid_spec=grid_spec,
        compiler_params=compiler_params,
        cost_estimate=cost,
    )(x2, w1c, b1_2d, w2c, b2_2d)

    if Mp != M:
        out = out[:M]
    return out.reshape(orig_shape)


# ---------------------------------------------------------------------------
# Parameter init (matches the PyTorch module: xavier_uniform weights, zero bias)
# ---------------------------------------------------------------------------
def init_feed_forward_params(key, embed_dim: int, ff_dim: int, dtype=jnp.float32):
    k1, k2 = jax.random.split(key)
    bound1 = (6.0 / (embed_dim + ff_dim)) ** 0.5
    bound2 = (6.0 / (ff_dim + embed_dim)) ** 0.5
    # Stored as (in, out) so the kernel computes x @ W + b (== PyTorch x @ W.T + b).
    w1 = jax.random.uniform(k1, (embed_dim, ff_dim), dtype, -bound1, bound1)
    w2 = jax.random.uniform(k2, (ff_dim, embed_dim), dtype, -bound2, bound2)
    b1 = jnp.zeros((ff_dim,), dtype)
    b2 = jnp.zeros((embed_dim,), dtype)
    return w1, b1, w2, b2


if __name__ == "__main__":
    # Small shapes consistent with the module's (batch, seq, embed_dim) inputs.
    batch, seq = 2, 8
    embed_dim, ff_dim = 256, 512

    key = jax.random.PRNGKey(0)
    kx, kp = jax.random.split(key)
    x = jax.random.normal(kx, (batch, seq, embed_dim), dtype=jnp.float32)
    w1, b1, w2, b2 = init_feed_forward_params(kp, embed_dim, ff_dim)

    out = jax.block_until_ready(feed_forward(x, w1, b1, w2, b2))
    assert out.shape == (batch, seq, embed_dim)
    assert out.dtype == x.dtype

    # Reference mirroring the kernel numerics (bf16 MXU operands, f32 accumulate).
    xb, w1b, w2b = (a.astype(jnp.bfloat16) for a in (x, w1, w2))
    h = jnp.dot(xb, w1b, preferred_element_type=jnp.float32) + b1
    h = jnp.maximum(h, 0.01 * h)
    ref_bf16 = jnp.dot(h.astype(jnp.bfloat16), w2b,
                       preferred_element_type=jnp.float32) + b2
    assert jnp.allclose(out, ref_bf16, atol=2e-2, rtol=2e-2), (
        float(jnp.max(jnp.abs(out - ref_bf16))))

    # Loose sanity check against the full-f32 PyTorch-equivalent reference
    # (bf16 MXU operands introduce an expected ~1e-2 level rounding difference).
    h32 = jnp.dot(x, w1, precision=jax.lax.Precision.HIGHEST) + b1
    h32 = jnp.maximum(h32, 0.01 * h32)
    ref_f32 = jnp.dot(h32, w2, precision=jax.lax.Precision.HIGHEST) + b2
    assert jnp.allclose(out, ref_f32, atol=1e-1, rtol=1e-1), (
        float(jnp.max(jnp.abs(out - ref_f32))))

    print("KERNEL_OK")
</pallas_src>

<mosaic_0001>
module attributes {stable_mosaic.version = 11 : i64} {
  func.func @_ffn_kernel_resident(%arg0: i32, %arg1: memref<16x256xbf16, #tpu.memory_space<vmem>>, %arg2: memref<256x512xbf16, #tpu.memory_space<vmem>>, %arg3: memref<1x512xf32, #tpu.memory_space<vmem>>, %arg4: memref<512x256xbf16, #tpu.memory_space<vmem>>, %arg5: memref<1x256xf32, #tpu.memory_space<vmem>>, %arg6: memref<16x256xf32, #tpu.memory_space<vmem>>) attributes {dimension_semantics = [#tpu.dimension_semantics<parallel>], iteration_bounds = array<i64: 1>, scalar_prefetch = 0 : i64, scratch_operands = 0 : i64, tpu.core_type = #tpu.core_type<tc>, window_params = [{transform_indices = @transform_0, window_bounds = array<i64: 16, 256>}, {pipeline_mode = #tpu.pipeline_mode<synchronous>, transform_indices = @transform_1, window_bounds = array<i64: 256, 512>}, {pipeline_mode = #tpu.pipeline_mode<synchronous>, transform_indices = @transform_2, window_bounds = array<i64: 1, 512>}, {pipeline_mode = #tpu.pipeline_mode<synchronous>, transform_indices = @transform_3, window_bounds = array<i64: 512, 256>}, {pipeline_mode = #tpu.pipeline_mode<synchronous>, transform_indices = @transform_4, window_bounds = array<i64: 1, 256>}, {transform_indices = @transform_5, window_bounds = array<i64: 16, 256>}]} {
    %c0 = arith.constant 0 : index
    %c0_0 = arith.constant 0 : index
    %0 = vector.load %arg1[%c0, %c0_0] : memref<16x256xbf16, #tpu.memory_space<vmem>>, vector<16x256xbf16>
    %c0_1 = arith.constant 0 : index
    %c0_2 = arith.constant 0 : index
    %1 = vector.load %arg2[%c0_1, %c0_2] : memref<256x512xbf16, #tpu.memory_space<vmem>>, vector<256x512xbf16>
    %cst = arith.constant dense<0.000000e+00> : vector<16x512xf32>
    %2 = tpu.matmul %0, %1, %cst {dimension_numbers = #tpu.dot_dimension_numbers<[1], [0], [0], [1], [0, 0, 1, 1], [], []>} : vector<16x256xbf16>, vector<256x512xbf16>, vector<16x512xf32> -> vector<16x512xf32>
    %c0_3 = arith.constant 0 : index
    %c0_4 = arith.constant 0 : index
    %3 = vector.load %arg3[%c0_3, %c0_4] : memref<1x512xf32, #tpu.memory_space<vmem>>, vector<1x512xf32>
    %4 = vector.broadcast %3 : vector<1x512xf32> to vector<16x512xf32>
    %5 = arith.addf %2, %4 : vector<16x512xf32>
    %cst_5 = arith.constant 0.00999999977 : f32
    %6 = vector.broadcast %cst_5 : f32 to vector<16x512xf32>
    %7 = arith.mulf %6, %5 : vector<16x512xf32>
    %8 = arith.maximumf %5, %7 : vector<16x512xf32>
    %9 = arith.truncf %8 : vector<16x512xf32> to vector<16x512xbf16>
    %c0_6 = arith.constant 0 : index
    %c0_7 = arith.constant 0 : index
    %10 = vector.load %arg4[%c0_6, %c0_7] : memref<512x256xbf16, #tpu.memory_space<vmem>>, vector<512x256xbf16>
    %cst_8 = arith.constant dense<0.000000e+00> : vector<16x256xf32>
    %11 = tpu.matmul %9, %10, %cst_8 {dimension_numbers = #tpu.dot_dimension_numbers<[1], [0], [0], [1], [0, 0, 1, 1], [], []>} : vector<16x512xbf16>, vector<512x256xbf16>, vector<16x256xf32> -> vector<16x256xf32>
    %c0_9 = arith.constant 0 : index
    %c0_10 = arith.constant 0 : index
    %12 = vector.load %arg5[%c0_9, %c0_10] : memref<1x256xf32, #tpu.memory_space<vmem>>, vector<1x256xf32>
    %13 = vector.broadcast %12 : vector<1x256xf32> to vector<16x256xf32>
    %14 = arith.addf %11, %13 : vector<16x256xf32>
    %c0_11 = arith.constant 0 : index
    %c0_12 = arith.constant 0 : index
    %15 = vector.load %arg6[%c0_11, %c0_12] : memref<16x256xf32, #tpu.memory_space<vmem>>, vector<16x256xf32>
    tpu.vector_store %arg6[%c0_11, %c0_12], %14 {strides = array<i32>} : memref<16x256xf32, #tpu.memory_space<vmem>>, vector<16x256xf32>,
    return
  }
  func.func @transform_0(%arg0: i32) -> (i32, i32) {
    %c0_i32 = arith.constant 0 : i32
    %c0_i32_0 = arith.constant 0 : i32
    return %arg0, %c0_i32 : i32, i32
  }
  func.func @transform_1(%arg0: i32) -> (i32, i32) {
    %c0_i32 = arith.constant 0 : i32
    %c0_i32_0 = arith.constant 0 : i32
    %c0_i32_1 = arith.constant 0 : i32
    return %c0_i32, %c0_i32_0 : i32, i32
  }
  func.func @transform_2(%arg0: i32) -> (i32, i32) {
    %c0_i32 = arith.constant 0 : i32
    %c0_i32_0 = arith.constant 0 : i32
    %c0_i32_1 = arith.constant 0 : i32
    return %c0_i32, %c0_i32_0 : i32, i32
  }
  func.func @transform_3(%arg0: i32) -> (i32, i32) {
    %c0_i32 = arith.constant 0 : i32
    %c0_i32_0 = arith.constant 0 : i32
    %c0_i32_1 = arith.constant 0 : i32
    return %c0_i32, %c0_i32_0 : i32, i32
  }
  func.func @transform_4(%arg0: i32) -> (i32, i32) {
    %c0_i32 = arith.constant 0 : i32
    %c0_i32_0 = arith.constant 0 : i32
    %c0_i32_1 = arith.constant 0 : i32
    return %c0_i32, %c0_i32_0 : i32, i32
  }
  func.func @transform_5(%arg0: i32) -> (i32, i32) {
    %c0_i32 = arith.constant 0 : i32
    %c0_i32_0 = arith.constant 0 : i32
    return %arg0, %c0_i32 : i32, i32
  }
}

</mosaic_0001>

<llo_original>
// kernel: tpu_custom_call.1
$region0: #{tpu_custom_call.1}
  #allocation0 [shape = 'u32[]', space=smem, size = 0x4, offset = 0x4, fixed_abs, tag = 'smem constant byte address 0x4 - core index']
  #allocation1 [shape = 'u32[72,128]{1,0:T(1,128)}', space=vmem, size = 0x9000, scoped, tag = 'internal scratch']
  %s0 = inlined_call_operand.hbm [shape: bf16[16,256], index: 0, kind: input, shape index: {}]
  %s1 = inlined_call_operand.hbm [shape: bf16[256,512], index: 1, kind: input, shape index: {}]
  %s2 = inlined_call_operand.hbm [shape: f32[1,512], index: 2, kind: input, shape index: {}]
  %s3 = inlined_call_operand.hbm [shape: bf16[512,256], index: 3, kind: input, shape index: {}]
  %s4 = inlined_call_operand.vmem [shape: f32[1,256], index: 4, kind: input, shape index: {}]
  %s5 = inlined_call_operand.hbm [shape: f32[16,256], index: 5, kind: output, shape index: {}]
  %s6 = sld [smem:[#allocation0]]
  $region46: #{tpu_custom_call.1} parent=0
    _
  %s8 = ssub.s32 1, %s6
  %s9 = scalar_select 0, %s8, %s6
  $region1: #{tpu_custom_call.1} parent=0
    #allocation2 [shape = 'u8[8192]{0}', space=vmem, size = 0x2000, scoped, tag = 'input window, operand 0, single buffered']
    #allocation3 [shape = 's32[1]{0}', space=sflag, size = 0x4, scoped, tag = 'scoped memory for tpu_custom_call.1']
    #allocation4 [shape = 's32[1]{0}', space=sflag, size = 0x4, scoped, tag = 'scoped memory for tpu_custom_call.1']
    #allocation5 [shape = 'u8[262144]{0}', space=vmem, size = 0x40000, scoped, tag = 'input window, operand 1, single buffered']
    #allocation6 [shape = 's32[1]{0}', space=sflag, size = 0x4, scoped, tag = 'scoped memory for tpu_custom_call.1']
    #allocation7 [shape = 'u8[2048]{0}', space=vmem, size = 0x800, scoped, tag = 'input window, operand 2, single buffered']
    #allocation8 [shape = 'u8[262144]{0}', space=vmem, size = 0x40000, scoped, tag = 'input window, operand 3, single buffered']
    #allocation9 [shape = 's32[1]{0}', space=sflag, size = 0x4, scoped, tag = 'scoped memory for tpu_custom_call.1']
    #allocation10 [shape = 'u8[16384]{0}', space=vmem, size = 0x4000, scoped, tag = 'output window, operand 0, single buffered']
    %10 = vsyncpa [#allocation3], 0
    %11 = vsyncpa [#allocation6], 0
    %12 = vsyncpa [#allocation9], 0
    %13 = vsyncpa [#allocation4], 0
    // Predicated region
    $region2: #{tpu_custom_call.1} parent=1 // pred_check
      _
    $region3: #{tpu_custom_call.1} parent=1 // pred_check_branch
      %15 = sbr.rel (0) target = $region5
    $region4: #{tpu_custom_call.1} parent=1 // pred_region
      %17 = vsyncadd [#allocation3], 0
      %s18 = sshll.u32 %s0, 4
      %s19 = int_to_ptr.hbm [resolvable:$true] %s18
      %s20 = sshll.u32 [#allocation2], 4
      %s21 = int_to_ptr.vmem [resolvable:$true] %s20
      %26 = dma.hbm_to_vmem [thread:$0]  %s19, 256, %s21, [#allocation3], 128, 128, 8
    $region5: #{tpu_custom_call.1} parent=1 // pred_fallthru
      _
    // Predicated region
    $region6: #{tpu_custom_call.1} parent=1 // pred_check
      _
    $region7: #{tpu_custom_call.1} parent=1 // pred_check_branch
      %28 = sbr.rel (0) target = $region9
    $region8: #{tpu_custom_call.1} parent=1 // pred_region
      %30 = vsyncadd [#allocation6], 0
      %s31 = sshll.u32 %s1, 4
      %s32 = int_to_ptr.hbm [resolvable:$true] %s31
      %s33 = sshll.u32 [#allocation5], 4
      %s34 = int_to_ptr.vmem [resolvable:$true] %s33
      %39 = dma.hbm_to_vmem [thread:$0]  %s32, 8192, %s34, [#allocation6], 256, 256, 16
    $region9: #{tpu_custom_call.1} parent=1 // pred_fallthru
      _
    // Predicated region
    $region10: #{tpu_custom_call.1} parent=1 // pred_check
      _
    $region11: #{tpu_custom_call.1} parent=1 // pred_check_branch
      %41 = sbr.rel (0) target = $region13
    $region12: #{tpu_custom_call.1} parent=1 // pred_region
      %43 = vsyncadd [#allocation6], 0
      %s45 = sshll.u32 %s2, 4
      %s46 = int_to_ptr.hbm [resolvable:$true] %s45
      %s47 = sshll.u32 [#allocation7], 4
      %s48 = int_to_ptr.vmem [resolvable:$true] %s47
      %50 = dma.hbm_to_vmem [thread:$0]  %s46, 64, %s48, [#allocation6]
    $region13: #{tpu_custom_call.1} parent=1 // pred_fallthru
      _
    // Predicated region
    $region14: #{tpu_custom_call.1} parent=1 // pred_check
      _
    $region15: #{tpu_custom_call.1} parent=1 // pred_check_branch
      %52 = sbr.rel (0) target = $region17
    $region16: #{tpu_custom_call.1} parent=1 // pred_region
      %54 = vsyncadd [#allocation9], 0
      %s55 = sshll.u32 %s3, 4
      %s56 = int_to_ptr.hbm [resolvable:$true] %s55
      %s57 = sshll.u32 [#allocation8], 4
      %s58 = int_to_ptr.vmem [resolvable:$true] %s57
      %63 = dma.hbm_to_vmem [thread:$0]  %s56, 8192, %s58, [#allocation9], 128, 128, 8
    $region17: #{tpu_custom_call.1} parent=1 // pred_fallthru
      _
    // Predicated region
    $region18: #{tpu_custom_call.1} parent=1 // pred_check
      _
    $region19: #{tpu_custom_call.1} parent=1 // pred_check_branch
      %65 = sbr.rel (0) target = $region21
    $region20: #{tpu_custom_call.1} parent=1 // pred_region
      _
    $region21: #{tpu_custom_call.1} parent=1 // pred_fallthru
      _
    // Predicated region
    $region22: #{tpu_custom_call.1} parent=1 // pred_check
      _
    $region23: #{tpu_custom_call.1} parent=1 // pred_check_branch
      %67 = sbr.rel (0) target = $region25
    $region24: #{tpu_custom_call.1} parent=1 // pred_region
      %69 = dma.done [#allocation3], 256
    $region25: #{tpu_custom_call.1} parent=1 // pred_fallthru
      _
    // Predicated region
    $region26: #{tpu_custom_call.1} parent=1 // pred_check
      _
    $region27: #{tpu_custom_call.1} parent=1 // pred_check_branch
      %71 = sbr.rel (0) target = $region29
    $region28: #{tpu_custom_call.1} parent=1 // pred_region
      %73 = dma.done [#allocation6], 8192
    $region29: #{tpu_custom_call.1} parent=1 // pred_fallthru
      _
    // Predicated region
    $region30: #{tpu_custom_call.1} parent=1 // pred_check
      _
    $region31: #{tpu_custom_call.1} parent=1 // pred_check_branch
      %75 = sbr.rel (0) target = $region33
    $region32: #{tpu_custom_call.1} parent=1 // pred_region
      %77 = dma.done [#allocation6], 64
    $region33: #{tpu_custom_call.1} parent=1 // pred_fallthru
      _
    // Predicated region
    $region34: #{tpu_custom_call.1} parent=1 // pred_check
      _
    $region35: #{tpu_custom_call.1} parent=1 // pred_check_branch
      %79 = sbr.rel (0) target = $region37
    $region36: #{tpu_custom_call.1} parent=1 // pred_region
      %81 = dma.done [#allocation9], 8192
    $region37: #{tpu_custom_call.1} parent=1 // pred_fallthru
      _
    %v82 = vld [vmem:[#allocation2] sm:$0xff]
    %v83 = vld [vmem:[#allocation2 + $0x8] sm:$0xff]
    %v84 = vld [vmem:[#allocation5] sm:$0xff]
    %v85 = vld [vmem:[#allocation5 + $0x8] sm:$0xff]
    %v86 = vld [vmem:[#allocation5 + $0x10] sm:$0xff]
    %v87 = vld [vmem:[#allocation5 + $0x18] sm:$0xff]
    %v88 = vld [vmem:[#allocation5 + $0x20] sm:$0xff]
    %v89 = vld [vmem:[#allocation5 + $0x28] sm:$0xff]
    %v90 = vld [vmem:[#allocation5 + $0x30] sm:$0xff]
    %v91 = vld [vmem:[#allocation5 + $0x38] sm:$0xff]
    %v92 = vld [vmem:[#allocation5 + $0x40] sm:$0xff]
    %v93 = vld [vmem:[#allocation5 + $0x48] sm:$0xff]
    %v94 = vld [vmem:[#allocation5 + $0x50] sm:$0xff]
    %v95 = vld [vmem:[#allocation5 + $0x58] sm:$0xff]
    %v96 = vld [vmem:[#allocation5 + $0x60] sm:$0xff]
    %v97 = vld [vmem:[#allocation5 + $0x68] sm:$0xff]
    %v98 = vld [vmem:[#allocation5 + $0x70] sm:$0xff]
    %v99 = vld [vmem:[#allocation5 + $0x78] sm:$0xff]
    %v100 = vld [vmem:[#allocation5 + $0x80] sm:$0xff]
    %v101 = vld [vmem:[#allocation5 + $0x88] sm:$0xff]
    %v102 = vld [vmem:[#allocation5 + $0x90] sm:$0xff]
    %v103 = vld [vmem:[#allocation5 + $0x98] sm:$0xff]
    %v104 = vld [vmem:[#allocation5 + $0xa0] sm:$0xff]
    %v105 = vld [vmem:[#allocation5 + $0xa8] sm:$0xff]
    %v106 = vld [vmem:[#allocation5 + $0xb0] sm:$0xff]
    %v107 = vld [vmem:[#allocation5 + $0xb8] sm:$0xff]
    %v108 = vld [vmem:[#allocation5 + $0xc0] sm:$0xff]
    %v109 = vld [vmem:[#allocation5 + $0xc8] sm:$0xff]
    %v110 = vld [vmem:[#allocation5 + $0xd0] sm:$0xff]
    %v111 = vld [vmem:[#allocation5 + $0xd8] sm:$0xff]
    %v112 = vld [vmem:[#allocation5 + $0xe0] sm:$0xff]
    %v113 = vld [vmem:[#allocation5 + $0xe8] sm:$0xff]
    %v114 = vld [vmem:[#allocation5 + $0xf0] sm:$0xff]
    %v115 = vld [vmem:[#allocation5 + $0xf8] sm:$0xff]
    %v116 = vld [vmem:[#allocation5 + $0x100] sm:$0xff]
    %v117 = vld [vmem:[#allocation5 + $0x108] sm:$0xff]
    %v118 = vld [vmem:[#allocation5 + $0x110] sm:$0xff]
    %v119 = vld [vmem:[#allocation5 + $0x118] sm:$0xff]
    %v120 = vld [vmem:[#allocation5 + $0x120] sm:$0xff]
    %v121 = vld [vmem:[#allocation5 + $0x128] sm:$0xff]
    %v122 = vld [vmem:[#allocation5 + $0x130] sm:$0xff]
    %v123 = vld [vmem:[#allocation5 + $0x138] sm:$0xff]
    %v124 = vld [vmem:[#allocation5 + $0x140] sm:$0xff]
    %v125 = vld [vmem:[#allocation5 + $0x148] sm:$0xff]
    %v126 = vld [vmem:[#allocation5 + $0x150] sm:$0xff]
    %v127 = vld [vmem:[#allocation5 + $0x158] sm:$0xff]
    %v128 = vld [vmem:[#allocation5 + $0x160] sm:$0xff]
    %v129 = vld [vmem:[#allocation5 + $0x168] sm:$0xff]
    %v130 = vld [vmem:[#allocation5 + $0x170] sm:$0xff]
    %v131 = vld [vmem:[#allocation5 + $0x178] sm:$0xff]
    %v132 = vld [vmem:[#allocation5 + $0x180] sm:$0xff]
    %v133 = vld [vmem:[#allocation5 + $0x188] sm:$0xff]
    %v134 = vld [vmem:[#allocation5 + $0x190] sm:$0xff]
    %v135 = vld [vmem:[#allocation5 + $0x198] sm:$0xff]
    %v136 = vld [vmem:[#allocation5 + $0x1a0] sm:$0xff]
    %v137 = vld [vmem:[#allocation5 + $0x1a8] sm:$0xff]
    %v138 = vld [vmem:[#allocation5 + $0x1b0] sm:$0xff]
    %v139 = vld [vmem:[#allocation5 + $0x1b8] sm:$0xff]
    %v140 = vld [vmem:[#allocation5 + $0x1c0] sm:$0xff]
    %v141 = vld [vmem:[#allocation5 + $0x1c8] sm:$0xff]
    %v142 = vld [vmem:[#allocation5 + $0x1d0] sm:$0xff]
    %v143 = vld [vmem:[#allocation5 + $0x1d8] sm:$0xff]
    %v144 = vld [vmem:[#allocation5 + $0x1e0] sm:$0xff]
    %v145 = vld [vmem:[#allocation5 + $0x1e8] sm:$0xff]
    %v146 = vld [vmem:[#allocation5 + $0x1f0] sm:$0xff]
    %v147 = vld [vmem:[#allocation5 + $0x1f8] sm:$0xff]
    %v148 = vld [vmem:[#allocation7] sm:$0xf]
    %v150 = vperm.slane %v148, 0
    %v151 = vperm.slane %v148, 1
    %v152 = vperm.slane %v148, 2
    %v153 = vperm.slane %v148, 3
    %v160 = vunpack.c.l.b16 %v82
    %v161 = vunpack.c.h.b16 %v82
    %v162 = vunpack.c.l.b16 %v83
    %v163 = vunpack.c.h.b16 %v83
    %v164 = vpack.c.b16 %v162, %v160
    %v165 = vpack.c.b16 %v163, %v161
    %v232 = vunpack.c.l.b16 %v84
    %v233 = vunpack.c.h.b16 %v84
    %v234 = vunpack.c.l.b16 %v85
    %v235 = vunpack.c.h.b16 %v85
    %v236 = vunpack.c.l.b16 %v86
    %v237 = vunpack.c.h.b16 %v86
    %v238 = vunpack.c.l.b16 %v87
    %v239 = vunpack.c.h.b16 %v87
    %v240 = vunpack.c.l.b16 %v88
    %v241 = vunpack.c.h.b16 %v88
    %v242 = vunpack.c.l.b16 %v89
    %v243 = vunpack.c.h.b16 %v89
    %v244 = vunpack.c.l.b16 %v90
    %v245 = vunpack.c.h.b16 %v90
    %v246 = vunpack.c.l.b16 %v91
    %v247 = vunpack.c.h.b16 %v91
    %v248 = vunpack.c.l.b16 %v92
    %v249 = vunpack.c.h.b16 %v92
    %v250 = vunpack.c.l.b16 %v93
    %v251 = vunpack.c.h.b16 %v93
    %v252 = vunpack.c.l.b16 %v94
    %v253 = vunpack.c.h.b16 %v94
    %v254 = vunpack.c.l.b16 %v95
    %v255 = vunpack.c.h.b16 %v95
    %v256 = vunpack.c.l.b16 %v96
    %v257 = vunpack.c.h.b16 %v96
    %v258 = vunpack.c.l.b16 %v97
    %v259 = vunpack.c.h.b16 %v97
    %v260 = vunpack.c.l.b16 %v98
    %v261 = vunpack.c.h.b16 %v98
    %v262 = vunpack.c.l.b16 %v99
    %v263 = vunpack.c.h.b16 %v99
    %v264 = vunpack.c.l.b16 %v100
    %v265 = vunpack.c.h.b16 %v100
    %v266 = vunpack.c.l.b16 %v101
    %v267 = vunpack.c.h.b16 %v101
    %v268 = vunpack.c.l.b16 %v102
    %v269 = vunpack.c.h.b16 %v102
    %v270 = vunpack.c.l.b16 %v103
    %v271 = vunpack.c.h.b16 %v103
    %v272 = vunpack.c.l.b16 %v104
    %v273 = vunpack.c.h.b16 %v104
    %v274 = vunpack.c.l.b16 %v105
    %v275 = vunpack.c.h.b16 %v105
    %v276 = vunpack.c.l.b16 %v106
    %v277 = vunpack.c.h.b16 %v106
    %v278 = vunpack.c.l.b16 %v107
    %v279 = vunpack.c.h.b16 %v107
    %v280 = vunpack.c.l.b16 %v108
    %v281 = vunpack.c.h.b16 %v108
    %v282 = vunpack.c.l.b16 %v109
    %v283 = vunpack.c.h.b16 %v109
    %v284 = vunpack.c.l.b16 %v110
    %v285 = vunpack.c.h.b16 %v110
    %v286 = vunpack.c.l.b16 %v111
    %v287 = vunpack.c.h.b16 %v111
    %v288 = vunpack.c.l.b16 %v112
    %v289 = vunpack.c.h.b16 %v112
    %v290 = vunpack.c.l.b16 %v113
    %v291 = vunpack.c.h.b16 %v113
    %v292 = vunpack.c.l.b16 %v114
    %v293 = vunpack.c.h.b16 %v114
    %v294 = vunpack.c.l.b16 %v115
    %v295 = vunpack.c.h.b16 %v115
    %v296 = vunpack.c.l.b16 %v116
    %v297 = vunpack.c.h.b16 %v116
    %v298 = vunpack.c.l.b16 %v117
    %v299 = vunpack.c.h.b16 %v117
    %v300 = vunpack.c.l.b16 %v118
    %v301 = vunpack.c.h.b16 %v118
    %v302 = vunpack.c.l.b16 %v119
    %v303 = vunpack.c.h.b16 %v119
    %v304 = vunpack.c.l.b16 %v120
    %v305 = vunpack.c.h.b16 %v120
    %v306 = vunpack.c.l.b16 %v121
    %v307 = vunpack.c.h.b16 %v121
    %v308 = vunpack.c.l.b16 %v122
    %v309 = vunpack.c.h.b16 %v122
    %v310 = vunpack.c.l.b16 %v123
    %v311 = vunpack.c.h.b16 %v123
    %v312 = vunpack.c.l.b16 %v124
    %v313 = vunpack.c.h.b16 %v124
    %v314 = vunpack.c.l.b16 %v125
    %v315 = vunpack.c.h.b16 %v125
    %v316 = vunpack.c.l.b16 %v126
    %v317 = vunpack.c.h.b16 %v126
    %v318 = vunpack.c.l.b16 %v127
    %v319 = vunpack.c.h.b16 %v127
    %v320 = vunpack.c.l.b16 %v128
    %v321 = vunpack.c.h.b16 %v128
    %v322 = vunpack.c.l.b16 %v129
    %v323 = vunpack.c.h.b16 %v129
    %v324 = vunpack.c.l.b16 %v130
    %v325 = vunpack.c.h.b16 %v130
    %v326 = vunpack.c.l.b16 %v131
    %v327 = vunpack.c.h.b16 %v131
    %v328 = vunpack.c.l.b16 %v132
    %v329 = vunpack.c.h.b16 %v132
    %v330 = vunpack.c.l.b16 %v133
    %v331 = vunpack.c.h.b16 %v133
    %v332 = vunpack.c.l.b16 %v134
    %v333 = vunpack.c.h.b16 %v134
    %v334 = vunpack.c.l.b16 %v135
    %v335 = vunpack.c.h.b16 %v135
    %v336 = vunpack.c.l.b16 %v136
    %v337 = vunpack.c.h.b16 %v136
    %v338 = vunpack.c.l.b16 %v137
    %v339 = vunpack.c.h.b16 %v137
    %v340 = vunpack.c.l.b16 %v138
    %v341 = vunpack.c.h.b16 %v138
    %v342 = vunpack.c.l.b16 %v139
    %v343 = vunpack.c.h.b16 %v139
    %v344 = vunpack.c.l.b16 %v140
    %v345 = vunpack.c.h.b16 %v140
    %v346 = vunpack.c.l.b16 %v141
    %v347 = vunpack.c.h.b16 %v141
    %v348 = vunpack.c.l.b16 %v142
    %v349 = vunpack.c.h.b16 %v142
    %v350 = vunpack.c.l.b16 %v143
    %v351 = vunpack.c.h.b16 %v143
    %v352 = vunpack.c.l.b16 %v144
    %v353 = vunpack.c.h.b16 %v144
    %v354 = vunpack.c.l.b16 %v145
    %v355 = vunpack.c.h.b16 %v145
    %v356 = vunpack.c.l.b16 %v146
    %v357 = vunpack.c.h.b16 %v146
    %v358 = vunpack.c.l.b16 %v147
    %v359 = vunpack.c.h.b16 %v147
    %v360 = vpack.c.b16 %v236, %v232
    %v361 = vpack.c.b16 %v237, %v233
    %v362 = vpack.c.b16 %v238, %v234
    %v363 = vpack.c.b16 %v239, %v235
    %v364 = vpack.c.b16 %v244, %v240
    %v365 = vpack.c.b16 %v245, %v241
    %v366 = vpack.c.b16 %v246, %v242
    %v367 = vpack.c.b16 %v247, %v243
    %v368 = vpack.c.b16 %v252, %v248
    %v369 = vpack.c.b16 %v253, %v249
    %v370 = vpack.c.b16 %v254, %v250
    %v371 = vpack.c.b16 %v255, %v251
    %v372 = vpack.c.b16 %v260, %v256
    %v373 = vpack.c.b16 %v261, %v257
    %v374 = vpack.c.b16 %v262, %v258
    %v375 = vpack.c.b16 %v263, %v259
    %v376 = vpack.c.b16 %v268, %v264
    %v377 = vpack.c.b16 %v269, %v265
    %v378 = vpack.c.b16 %v270, %v266
    %v379 = vpack.c.b16 %v271, %v267
    %v380 = vpack.c.b16 %v276, %v272
    %v381 = vpack.c.b16 %v277, %v273
    %v382 = vpack.c.b16 %v278, %v274
    %v383 = vpack.c.b16 %v279, %v275
    %v384 = vpack.c.b16 %v284, %v280
    %v385 = vpack.c.b16 %v285, %v281
    %v386 = vpack.c.b16 %v286, %v282
    %v387 = vpack.c.b16 %v287, %v283
    %v388 = vpack.c.b16 %v292, %v288
    %v389 = vpack.c.b16 %v293, %v289
    %v390 = vpack.c.b16 %v294, %v290
    %v391 = vpack.c.b16 %v295, %v291
    %v392 = vpack.c.b16 %v300, %v296
    %v393 = vpack.c.b16 %v301, %v297
    %v394 = vpack.c.b16 %v302, %v298
    %v395 = vpack.c.b16 %v303, %v299
    %v396 = vpack.c.b16 %v308, %v304
    %v397 = vpack.c.b16 %v309, %v305
    %v398 = vpack.c.b16 %v310, %v306
    %v399 = vpack.c.b16 %v311, %v307
    %v400 = vpack.c.b16 %v316, %v312
    %v401 = vpack.c.b16 %v317, %v313
    %v402 = vpack.c.b16 %v318, %v314
    %v403 = vpack.c.b16 %v319, %v315
    %v404 = vpack.c.b16 %v324, %v320
    %v405 = vpack.c.b16 %v325, %v321
    %v406 = vpack.c.b16 %v326, %v322
    %v407 = vpack.c.b16 %v327, %v323
    %v408 = vpack.c.b16 %v332, %v328
    %v409 = vpack.c.b16 %v333, %v329
    %v410 = vpack.c.b16 %v334, %v330
    %v411 = vpack.c.b16 %v335, %v331
    %v412 = vpack.c.b16 %v340, %v336
    %v413 = vpack.c.b16 %v341, %v337
    %v414 = vpack.c.b16 %v342, %v338
    %v415 = vpack.c.b16 %v343, %v339
    %v416 = vpack.c.b16 %v348, %v344
    %v417 = vpack.c.b16 %v349, %v345
    %v418 = vpack.c.b16 %v350, %v346
    %v419 = vpack.c.b16 %v351, %v347
    %v420 = vpack.c.b16 %v356, %v352
    %v421 = vpack.c.b16 %v357, %v353
    %v422 = vpack.c.b16 %v358, %v354
    %v423 = vpack.c.b16 %v359, %v355
    %488 = vmatpush.bf16.msra.mxu0 %v388
    %489 = vmatpush.bf16.msra.mxu0 %v384
    %490 = vmatpush.bf16.msra.mxu0 %v380
    %491 = vmatpush.bf16.msra.mxu0 %v376
    %492 = vmatpush.bf16.msra.mxu0 %v372
    %493 = vmatpush.bf16.msra.mxu0 %v368
    %494 = vmatpush.bf16.msra.mxu0 %v364
    %495 = vmatpush.bf16.msra.mxu0 %v360
    %496 = vmatmul.bf16.gmra.mxu0 %v164
    %v497 = vpop.f32.mrf.mxu0
    %v498 = vadd.f32 %v150, %v497
    %v499 = vpop.f32.mrf.mxu0
    %v500 = vadd.f32 %v150, %v499
    %501 = vdwg.mxu0
    %502 = vmatpush.bf16.msra.mxu0 %v420
    %503 = vmatpush.bf16.msra.mxu0 %v416
    %504 = vmatpush.bf16.msra.mxu0 %v412
    %505 = vmatpush.bf16.msra.mxu0 %v408
    %506 = vmatpush.bf16.msra.mxu0 %v404
    %507 = vmatpush.bf16.msra.mxu0 %v400
    %508 = vmatpush.bf16.msra.mxu0 %v396
    %509 = vmatpush.bf16.msra.mxu0 %v392
    %510 = vmatmul.bf16.gmra.mxu0 %v165
    %v511 = vpop.f32.mrf.mxu0
    %v512 = vadd.f32 %v498, %v511
    %v513 = vpop.f32.mrf.mxu0
    %v514 = vadd.f32 %v500, %v513
    %515 = vdwg.mxu0
    %516 = vmatpush.bf16.msra.mxu0 %v389
    %517 = vmatpush.bf16.msra.mxu0 %v385
    %518 = vmatpush.bf16.msra.mxu0 %v381
    %519 = vmatpush.bf16.msra.mxu0 %v377
    %520 = vmatpush.bf16.msra.mxu0 %v373
    %521 = vmatpush.bf16.msra.mxu0 %v369
    %522 = vmatpush.bf16.msra.mxu0 %v365
    %523 = vmatpush.bf16.msra.mxu0 %v361
    %524 = vmatmul.bf16.gmra.mxu0 %v164
    %v525 = vpop.f32.mrf.mxu0
    %v526 = vadd.f32 %v151, %v525
    %v527 = vpop.f32.mrf.mxu0
    %v528 = vadd.f32 %v151, %v527
    %529 = vdwg.mxu0
    %530 = vmatpush.bf16.msra.mxu0 %v421
    %531 = vmatpush.bf16.msra.mxu0 %v417
    %532 = vmatpush.bf16.msra.mxu0 %v413
    %533 = vmatpush.bf16.msra.mxu0 %v409
    %534 = vmatpush.bf16.msra.mxu0 %v405
    %535 = vmatpush.bf16.msra.mxu0 %v401
    %536 = vmatpush.bf16.msra.mxu0 %v397
    %537 = vmatpush.bf16.msra.mxu0 %v393
    %538 = vmatmul.bf16.gmra.mxu0 %v165
    %v539 = vpop.f32.mrf.mxu0
    %v540 = vadd.f32 %v526, %v539
    %v541 = vpop.f32.mrf.mxu0
    %v542 = vadd.f32 %v528, %v541
    %543 = vdwg.mxu0
    %544 = vmatpush.bf16.msra.mxu0 %v390
    %545 = vmatpush.bf16.msra.mxu0 %v386
    %546 = vmatpush.bf16.msra.mxu0 %v382
    %547 = vmatpush.bf16.msra.mxu0 %v378
    %548 = vmatpush.bf16.msra.mxu0 %v374
    %549 = vmatpush.bf16.msra.mxu0 %v370
    %550 = vmatpush.bf16.msra.mxu0 %v366
    %551 = vmatpush.bf16.msra.mxu0 %v362
    %552 = vmatmul.bf16.gmra.mxu0 %v164
    %v553 = vpop.f32.mrf.mxu0
    %v554 = vadd.f32 %v152, %v553
    %v555 = vpop.f32.mrf.mxu0
    %v556 = vadd.f32 %v152, %v555
    %557 = vdwg.mxu0
    %558 = vmatpush.bf16.msra.mxu0 %v422
    %559 = vmatpush.bf16.msra.mxu0 %v418
    %560 = vmatpush.bf16.msra.mxu0 %v414
    %561 = vmatpush.bf16.msra.mxu0 %v410
    %562 = vmatpush.bf16.msra.mxu0 %v406
    %563 = vmatpush.bf16.msra.mxu0 %v402
    %564 = vmatpush.bf16.msra.mxu0 %v398
    %565 = vmatpush.bf16.msra.mxu0 %v394
    %566 = vmatmul.bf16.gmra.mxu0 %v165
    %v567 = vpop.f32.mrf.mxu0
    %v568 = vadd.f32 %v554, %v567
    %v569 = vpop.f32.mrf.mxu0
    %v570 = vadd.f32 %v556, %v569
    %571 = vdwg.mxu0
    %572 = vmatpush.bf16.msra.mxu0 %v391
    %573 = vmatpush.bf16.msra.mxu0 %v387
    %574 = vmatpush.bf16.msra.mxu0 %v383
    %575 = vmatpush.bf16.msra.mxu0 %v379
    %576 = vmatpush.bf16.msra.mxu0 %v375
    %577 = vmatpush.bf16.msra.mxu0 %v371
    %578 = vmatpush.bf16.msra.mxu0 %v367
    %579 = vmatpush.bf16.msra.mxu0 %v363
    %580 = vmatmul.bf16.gmra.mxu0 %v164
    %v581 = vpop.f32.mrf.mxu0
    %v582 = vadd.f32 %v153, %v581
    %v583 = vpop.f32.mrf.mxu0
    %v584 = vadd.f32 %v153, %v583
    %585 = vdwg.mxu0
    %586 = vmatpush.bf16.msra.mxu0 %v423
    %587 = vmatpush.bf16.msra.mxu0 %v419
    %588 = vmatpush.bf16.msra.mxu0 %v415
    %589 = vmatpush.bf16.msra.mxu0 %v411
    %590 = vmatpush.bf16.msra.mxu0 %v407
    %591 = vmatpush.bf16.msra.mxu0 %v403
    %592 = vmatpush.bf16.msra.mxu0 %v399
    %593 = vmatpush.bf16.msra.mxu0 %v395
    %594 = vmatmul.bf16.gmra.mxu0 %v165
    %v595 = vpop.f32.mrf.mxu0
    %v596 = vadd.f32 %v582, %v595
    %v597 = vpop.f32.mrf.mxu0
    %v598 = vadd.f32 %v584, %v597
    %599 = vdwg.mxu0
    %v600 = vmul.f32 %v512, 0.01
    %v601 = vmul.f32 %v540, 0.01
    %v602 = vmul.f32 %v568, 0.01
    %v603 = vmul.f32 %v596, 0.01
    %v604 = vmul.f32 %v514, 0.01
    %v605 = vmul.f32 %v542, 0.01
    %v606 = vmul.f32 %v570, 0.01
    %v607 = vmul.f32 %v598, 0.01
    %v608 = vmax.f32 %v512, %v600
    %v609 = vmax.f32 %v540, %v601
    %v610 = vmax.f32 %v568, %v602
    %v611 = vmax.f32 %v596, %v603
    %v612 = vmax.f32 %v514, %v604
    %v613 = vmax.f32 %v542, %v605
    %v614 = vmax.f32 %v570, %v606
    %v615 = vmax.f32 %v598, %v607
    %v616 = vpack.c.bf16 %v612, %v608
    %v617 = vpack.c.bf16 %v613, %v609
    %v618 = vpack.c.bf16 %v614, %v610
    %v619 = vpack.c.bf16 %v615, %v611
    %v620 = vld [vmem:[#allocation8] sm:$0xff]
    %v621 = vld [vmem:[#allocation8 + $0x8] sm:$0xff]
    %v622 = vld [vmem:[#allocation8 + $0x10] sm:$0xff]
    %v623 = vld [vmem:[#allocation8 + $0x18] sm:$0xff]
    %v624 = vld [vmem:[#allocation8 + $0x20] sm:$0xff]
    %v625 = vld [vmem:[#allocation8 + $0x28] sm:$0xff]
    %v626 = vld [vmem:[#allocation8 + $0x30] sm:$0xff]
    %v627 = vld [vmem:[#allocation8 + $0x38] sm:$0xff]
    %v628 = vld [vmem:[#allocation8 + $0x40] sm:$0xff]
    %v629 = vld [vmem:[#allocation8 + $0x48] sm:$0xff]
    %v630 = vld [vmem:[#allocation8 + $0x50] sm:$0xff]
    %v631 = vld [vmem:[#allocation8 + $0x58] sm:$0xff]
    %v632 = vld [vmem:[#allocation8 + $0x60] sm:$0xff]
    %v633 = vld [vmem:[#allocation8 + $0x68] sm:$0xff]
    %v634 = vld [vmem:[#allocation8 + $0x70] sm:$0xff]
    %v635 = vld [vmem:[#allocation8 + $0x78] sm:$0xff]
    %v636 = vld [vmem:[#allocation8 + $0x80] sm:$0xff]
    %v637 = vld [vmem:[#allocation8 + $0x88] sm:$0xff]
    %v638 = vld [vmem:[#allocation8 + $0x90] sm:$0xff]
    %v639 = vld [vmem:[#allocation8 + $0x98] sm:$0xff]
    %v640 = vld [vmem:[#allocation8 + $0xa0] sm:$0xff]
    %v641 = vld [vmem:[#allocation8 + $0xa8] sm:$0xff]
    %v642 = vld [vmem:[#allocation8 + $0xb0] sm:$0xff]
    %v643 = vld [vmem:[#allocation8 + $0xb8] sm:$0xff]
    %v644 = vld [vmem:[#allocation8 + $0xc0] sm:$0xff]
    %v645 = vld [vmem:[#allocation8 + $0xc8] sm:$0xff]
    %v646 = vld [vmem:[#allocation8 + $0xd0] sm:$0xff]
    %v647 = vld [vmem:[#allocation8 + $0xd8] sm:$0xff]
    %v648 = vld [vmem:[#allocation8 + $0xe0] sm:$0xff]
    %v649 = vld [vmem:[#allocation8 + $0xe8] sm:$0xff]
    %v650 = vld [vmem:[#allocation8 + $0xf0] sm:$0xff]
    %v651 = vld [vmem:[#allocation8 + $0xf8] sm:$0xff]
    %v652 = vld [vmem:[#allocation8 + $0x100] sm:$0xff]
    %v653 = vld [vmem:[#allocation8 + $0x108] sm:$0xff]
    %v654 = vld [vmem:[#allocation8 + $0x110] sm:$0xff]
    %v655 = vld [vmem:[#allocation8 + $0x118] sm:$0xff]
    %v656 = vld [vmem:[#allocation8 + $0x120] sm:$0xff]
    %v657 = vld [vmem:[#allocation8 + $0x128] sm:$0xff]
    %v658 = vld [vmem:[#allocation8 + $0x130] sm:$0xff]
    %v659 = vld [vmem:[#allocation8 + $0x138] sm:$0xff]
    %v660 = vld [vmem:[#allocation8 + $0x140] sm:$0xff]
    %v661 = vld [vmem:[#allocation8 + $0x148] sm:$0xff]
    %v662 = vld [vmem:[#allocation8 + $0x150] sm:$0xff]
    %v663 = vld [vmem:[#allocation8 + $0x158] sm:$0xff]
    %v664 = vld [vmem:[#allocation8 + $0x160] sm:$0xff]
    %v665 = vld [vmem:[#allocation8 + $0x168] sm:$0xff]
    %v666 = vld [vmem:[#allocation8 + $0x170] sm:$0xff]
    %v667 = vld [vmem:[#allocation8 + $0x178] sm:$0xff]
    %v668 = vld [vmem:[#allocation8 + $0x180] sm:$0xff]
    %v669 = vld [vmem:[#allocation8 + $0x188] sm:$0xff]
    %v670 = vld [vmem:[#allocation8 + $0x190] sm:$0xff]
    %v671 = vld [vmem:[#allocation8 + $0x198] sm:$0xff]
    %v672 = vld [vmem:[#allocation8 + $0x1a0] sm:$0xff]
    %v673 = vld [vmem:[#allocation8 + $0x1a8] sm:$0xff]
    %v674 = vld [vmem:[#allocation8 + $0x1b0] sm:$0xff]
    %v675 = vld [vmem:[#allocation8 + $0x1b8] sm:$0xff]
    %v676 = vld [vmem:[#allocation8 + $0x1c0] sm:$0xff]
    %v677 = vld [vmem:[#allocation8 + $0x1c8] sm:$0xff]
    %v678 = vld [vmem:[#allocation8 + $0x1d0] sm:$0xff]
    %v679 = vld [vmem:[#allocation8 + $0x1d8] sm:$0xff]
    %v680 = vld [vmem:[#allocation8 + $0x1e0] sm:$0xff]
    %v681 = vld [vmem:[#allocation8 + $0x1e8] sm:$0xff]
    %v682 = vld [vmem:[#allocation8 + $0x1f0] sm:$0xff]
    %v683 = vld [vmem:[#allocation8 + $0x1f8] sm:$0xff]
    %v684 = vld [vmem:[%s4] sm:$0x3]
    %v686 = vperm.slane %v684, 0
    %v687 = vperm.slane %v684, 1
    %v754 = vunpack.c.l.b16 %v620
    %v755 = vunpack.c.h.b16 %v620
    %v756 = vunpack.c.l.b16 %v621
    %v757 = vunpack.c.h.b16 %v621
    %v758 = vunpack.c.l.b16 %v622
    %v759 = vunpack.c.h.b16 %v622
    %v760 = vunpack.c.l.b16 %v623
    %v761 = vunpack.c.h.b16 %v623
    %v762 = vunpack.c.l.b16 %v624
    %v763 = vunpack.c.h.b16 %v624
    %v764 = vunpack.c.l.b16 %v625
    %v765 = vunpack.c.h.b16 %v625
    %v766 = vunpack.c.l.b16 %v626
    %v767 = vunpack.c.h.b16 %v626
    %v768 = vunpack.c.l.b16 %v627
    %v769 = vunpack.c.h.b16 %v627
    %v770 = vunpack.c.l.b16 %v628
    %v771 = vunpack.c.h.b16 %v628
    %v772 = vunpack.c.l.b16 %v629
    %v773 = vunpack.c.h.b16 %v629
    %v774 = vunpack.c.l.b16 %v630
    %v775 = vunpack.c.h.b16 %v630
    %v776 = vunpack.c.l.b16 %v631
    %v777 = vunpack.c.h.b16 %v631
    %v778 = vunpack.c.l.b16 %v632
    %v779 = vunpack.c.h.b16 %v632
    %v780 = vunpack.c.l.b16 %v633
    %v781 = vunpack.c.h.b16 %v633
    %v782 = vunpack.c.l.b16 %v634
    %v783 = vunpack.c.h.b16 %v634
    %v784 = vunpack.c.l.b16 %v635
    %v785 = vunpack.c.h.b16 %v635
    %v786 = vunpack.c.l.b16 %v636
    %v787 = vunpack.c.h.b16 %v636
    %v788 = vunpack.c.l.b16 %v637
    %v789 = vunpack.c.h.b16 %v637
    %v790 = vunpack.c.l.b16 %v638
    %v791 = vunpack.c.h.b16 %v638
    %v792 = vunpack.c.l.b16 %v639
    %v793 = vunpack.c.h.b16 %v639
    %v794 = vunpack.c.l.b16 %v640
    %v795 = vunpack.c.h.b16 %v640
    %v796 = vunpack.c.l.b16 %v641
    %v797 = vunpack.c.h.b16 %v641
    %v798 = vunpack.c.l.b16 %v642
    %v799 = vunpack.c.h.b16 %v642
    %v800 = vunpack.c.l.b16 %v643
    %v801 = vunpack.c.h.b16 %v643
    %v802 = vunpack.c.l.b16 %v644
    %v803 = vunpack.c.h.b16 %v644
    %v804 = vunpack.c.l.b16 %v645
    %v805 = vunpack.c.h.b16 %v645
    %v806 = vunpack.c.l.b16 %v646
    %v807 = vunpack.c.h.b16 %v646
    %v808 = vunpack.c.l.b16 %v647
    %v809 = vunpack.c.h.b16 %v647
    %v810 = vunpack.c.l.b16 %v648
    %v811 = vunpack.c.h.b16 %v648
    %v812 = vunpack.c.l.b16 %v649
    %v813 = vunpack.c.h.b16 %v649
    %v814 = vunpack.c.l.b16 %v650
    %v815 = vunpack.c.h.b16 %v650
    %v816 = vunpack.c.l.b16 %v651
    %v817 = vunpack.c.h.b16 %v651
    %v818 = vunpack.c.l.b16 %v652
    %v819 = vunpack.c.h.b16 %v652
    %v820 = vunpack.c.l.b16 %v653
    %v821 = vunpack.c.h.b16 %v653
    %v822 = vunpack.c.l.b16 %v654
    %v823 = vunpack.c.h.b16 %v654
    %v824 = vunpack.c.l.b16 %v655
    %v825 = vunpack.c.h.b16 %v655
    %v826 = vunpack.c.l.b16 %v656
    %v827 = vunpack.c.h.b16 %v656
    %v828 = vunpack.c.l.b16 %v657
    %v829 = vunpack.c.h.b16 %v657
    %v830 = vunpack.c.l.b16 %v658
    %v831 = vunpack.c.h.b16 %v658
    %v832 = vunpack.c.l.b16 %v659
    %v833 = vunpack.c.h.b16 %v659
    %v834 = vunpack.c.l.b16 %v660
    %v835 = vunpack.c.h.b16 %v660
    %v836 = vunpack.c.l.b16 %v661
    %v837 = vunpack.c.h.b16 %v661
    %v838 = vunpack.c.l.b16 %v662
    %v839 = vunpack.c.h.b16 %v662
    %v840 = vunpack.c.l.b16 %v663
    %v841 = vunpack.c.h.b16 %v663
    %v842 = vunpack.c.l.b16 %v664
    %v843 = vunpack.c.h.b16 %v664
    %v844 = vunpack.c.l.b16 %v665
    %v845 = vunpack.c.h.b16 %v665
    %v846 = vunpack.c.l.b16 %v666
    %v847 = vunpack.c.h.b16 %v666
    %v848 = vunpack.c.l.b16 %v667
    %v849 = vunpack.c.h.b16 %v667
    %v850 = vunpack.c.l.b16 %v668
    %v851 = vunpack.c.h.b16 %v668
    %v852 = vunpack.c.l.b16 %v669
    %v853 = vunpack.c.h.b16 %v669
    %v854 = vunpack.c.l.b16 %v670
    %v855 = vunpack.c.h.b16 %v670
    %v856 = vunpack.c.l.b16 %v671
    %v857 = vunpack.c.h.b16 %v671
    %v858 = vunpack.c.l.b16 %v672
    %v859 = vunpack.c.h.b16 %v672
    %v860 = vunpack.c.l.b16 %v673
    %v861 = vunpack.c.h.b16 %v673
    %v862 = vunpack.c.l.b16 %v674
    %v863 = vunpack.c.h.b16 %v674
    %v864 = vunpack.c.l.b16 %v675
    %v865 = vunpack.c.h.b16 %v675
    %v866 = vunpack.c.l.b16 %v676
    %v867 = vunpack.c.h.b16 %v676
    %v868 = vunpack.c.l.b16 %v677
    %v869 = vunpack.c.h.b16 %v677
    %v870 = vunpack.c.l.b16 %v678
    %v871 = vunpack.c.h.b16 %v678
    %v872 = vunpack.c.l.b16 %v679
    %v873 = vunpack.c.h.b16 %v679
    %v874 = vunpack.c.l.b16 %v680
    %v875 = vunpack.c.h.b16 %v680
    %v876 = vunpack.c.l.b16 %v681
    %v877 = vunpack.c.h.b16 %v681
    %v878 = vunpack.c.l.b16 %v682
    %v879 = vunpack.c.h.b16 %v682
    %v880 = vunpack.c.l.b16 %v683
    %v881 = vunpack.c.h.b16 %v683
    %v882 = vpack.c.b16 %v756, %v754
    %v883 = vpack.c.b16 %v757, %v755
    %v884 = vpack.c.b16 %v760, %v758
    %v885 = vpack.c.b16 %v761, %v759
    %v886 = vpack.c.b16 %v764, %v762
    %v887 = vpack.c.b16 %v765, %v763
    %v888 = vpack.c.b16 %v768, %v766
    %v889 = vpack.c.b16 %v769, %v767
    %v890 = vpack.c.b16 %v772, %v770
    %v891 = vpack.c.b16 %v773, %v771
    %v892 = vpack.c.b16 %v776, %v774
    %v893 = vpack.c.b16 %v777, %v775
    %v894 = vpack.c.b16 %v780, %v778
    %v895 = vpack.c.b16 %v781, %v779
    %v896 = vpack.c.b16 %v784, %v782
    %v897 = vpack.c.b16 %v785, %v783
    %v898 = vpack.c.b16 %v788, %v786
    %v899 = vpack.c.b16 %v789, %v787
    %v900 = vpack.c.b16 %v792, %v790
    %v901 = vpack.c.b16 %v793, %v791
    %v902 = vpack.c.b16 %v796, %v794
    %v903 = vpack.c.b16 %v797, %v795
    %v904 = vpack.c.b16 %v800, %v798
    %v905 = vpack.c.b16 %v801, %v799
    %v906 = vpack.c.b16 %v804, %v802
    %v907 = vpack.c.b16 %v805, %v803
    %v908 = vpack.c.b16 %v808, %v806
    %v909 = vpack.c.b16 %v809, %v807
    %v910 = vpack.c.b16 %v812, %v810
    %v911 = vpack.c.b16 %v813, %v811
    %v912 = vpack.c.b16 %v816, %v814
    %v913 = vpack.c.b16 %v817, %v815
    %v914 = vpack.c.b16 %v820, %v818
    %v915 = vpack.c.b16 %v821, %v819
    %v916 = vpack.c.b16 %v824, %v822
    %v917 = vpack.c.b16 %v825, %v823
    %v918 = vpack.c.b16 %v828, %v826
    %v919 = vpack.c.b16 %v829, %v827
    %v920 = vpack.c.b16 %v832, %v830
    %v921 = vpack.c.b16 %v833, %v831
    %v922 = vpack.c.b16 %v836, %v834
    %v923 = vpack.c.b16 %v837, %v835
    %v924 = vpack.c.b16 %v840, %v838
    %v925 = vpack.c.b16 %v841, %v839
    %v926 = vpack.c.b16 %v844, %v842
    %v927 = vpack.c.b16 %v845, %v843
    %v928 = vpack.c.b16 %v848, %v846
    %v929 = vpack.c.b16 %v849, %v847
    %v930 = vpack.c.b16 %v852, %v850
    %v931 = vpack.c.b16 %v853, %v851
    %v932 = vpack.c.b16 %v856, %v854
    %v933 = vpack.c.b16 %v857, %v855
    %v934 = vpack.c.b16 %v860, %v858
    %v935 = vpack.c.b16 %v861, %v859
    %v936 = vpack.c.b16 %v864, %v862
    %v937 = vpack.c.b16 %v865, %v863
    %v938 = vpack.c.b16 %v868, %v866
    %v939 = vpack.c.b16 %v869, %v867
    %v940 = vpack.c.b16 %v872, %v870
    %v941 = vpack.c.b16 %v873, %v871
    %v942 = vpack.c.b16 %v876, %v874
    %v943 = vpack.c.b16 %v877, %v875
    %v944 = vpack.c.b16 %v880, %v878
    %v945 = vpack.c.b16 %v881, %v879
    %1010 = vmatpush.bf16.msra.mxu0 %v896
    %1011 = vmatpush.bf16.msra.mxu0 %v894
    %1012 = vmatpush.bf16.msra.mxu0 %v892
    %1013 = vmatpush.bf16.msra.mxu0 %v890
    %1014 = vmatpush.bf16.msra.mxu0 %v888
    %1015 = vmatpush.bf16.msra.mxu0 %v886
    %1016 = vmatpush.bf16.msra.mxu0 %v884
    %1017 = vmatpush.bf16.msra.mxu0 %v882
    %1018 = vmatmul.bf16.gmra.mxu0 %v616
    %v1019 = vpop.f32.mrf.mxu0
    %v1020 = vadd.f32 %v686, %v1019
    %v1021 = vpop.f32.mrf.mxu0
    %v1022 = vadd.f32 %v686, %v1021
    %1023 = vdwg.mxu0
    %1024 = vmatpush.bf16.msra.mxu0 %v912
    %1025 = vmatpush.bf16.msra.mxu0 %v910
    %1026 = vmatpush.bf16.msra.mxu0 %v908
    %1027 = vmatpush.bf16.msra.mxu0 %v906
    %1028 = vmatpush.bf16.msra.mxu0 %v904
    %1029 = vmatpush.bf16.msra.mxu0 %v902
    %1030 = vmatpush.bf16.msra.mxu0 %v900
    %1031 = vmatpush.bf16.msra.mxu0 %v898
    %1032 = vmatmul.bf16.gmra.mxu0 %v617
    %v1033 = vpop.f32.mrf.mxu0
    %v1034 = vadd.f32 %v1020, %v1033
    %v1035 = vpop.f32.mrf.mxu0
    %v1036 = vadd.f32 %v1022, %v1035
    %1037 = vdwg.mxu0
    %1038 = vmatpush.bf16.msra.mxu0 %v928
    %1039 = vmatpush.bf16.msra.mxu0 %v926
    %1040 = vmatpush.bf16.msra.mxu0 %v924
    %1041 = vmatpush.bf16.msra.mxu0 %v922
    %1042 = vmatpush.bf16.msra.mxu0 %v920
    %1043 = vmatpush.bf16.msra.mxu0 %v918
    %1044 = vmatpush.bf16.msra.mxu0 %v916
    %1045 = vmatpush.bf16.msra.mxu0 %v914
    %1046 = vmatmul.bf16.gmra.mxu0 %v618
    %v1047 = vpop.f32.mrf.mxu0
    %v1048 = vadd.f32 %v1034, %v1047
    %v1049 = vpop.f32.mrf.mxu0
    %v1050 = vadd.f32 %v1036, %v1049
    %1051 = vdwg.mxu0
    %1052 = vmatpush.bf16.msra.mxu0 %v944
    %1053 = vmatpush.bf16.msra.mxu0 %v942
    %1054 = vmatpush.bf16.msra.mxu0 %v940
    %1055 = vmatpush.bf16.msra.mxu0 %v938
    %1056 = vmatpush.bf16.msra.mxu0 %v936
    %1057 = vmatpush.bf16.msra.mxu0 %v934
    %1058 = vmatpush.bf16.msra.mxu0 %v932
    %1059 = vmatpush.bf16.msra.mxu0 %v930
    %1060 = vmatmul.bf16.gmra.mxu0 %v619
    %v1061 = vpop.f32.mrf.mxu0
    %v1062 = vadd.f32 %v1048, %v1061
    %v1063 = vpop.f32.mrf.mxu0
    %v1064 = vadd.f32 %v1050, %v1063
    %1065 = vdwg.mxu0
    %1066 = vmatpush.bf16.msra.mxu0 %v897
    %1067 = vmatpush.bf16.msra.mxu0 %v895
    %1068 = vmatpush.bf16.msra.mxu0 %v893
    %1069 = vmatpush.bf16.msra.mxu0 %v891
    %1070 = vmatpush.bf16.msra.mxu0 %v889
    %1071 = vmatpush.bf16.msra.mxu0 %v887
    %1072 = vmatpush.bf16.msra.mxu0 %v885
    %1073 = vmatpush.bf16.msra.mxu0 %v883
    %1074 = vmatmul.bf16.gmra.mxu0 %v616
    %v1075 = vpop.f32.mrf.mxu0
    %v1076 = vadd.f32 %v687, %v1075
    %v1077 = vpop.f32.mrf.mxu0
    %v1078 = vadd.f32 %v687, %v1077
    %1079 = vdwg.mxu0
    %1080 = vmatpush.bf16.msra.mxu0 %v913
    %1081 = vmatpush.bf16.msra.mxu0 %v911
    %1082 = vmatpush.bf16.msra.mxu0 %v909
    %1083 = vmatpush.bf16.msra.mxu0 %v907
    %1084 = vmatpush.bf16.msra.mxu0 %v905
    %1085 = vmatpush.bf16.msra.mxu0 %v903
    %1086 = vmatpush.bf16.msra.mxu0 %v901
    %1087 = vmatpush.bf16.msra.mxu0 %v899
    %1088 = vmatmul.bf16.gmra.mxu0 %v617
    %v1089 = vpop.f32.mrf.mxu0
    %v1090 = vadd.f32 %v1076, %v1089
    %v1091 = vpop.f32.mrf.mxu0
    %v1092 = vadd.f32 %v1078, %v1091
    %1093 = vdwg.mxu0
    %1094 = vmatpush.bf16.msra.mxu0 %v929
    %1095 = vmatpush.bf16.msra.mxu0 %v927
    %1096 = vmatpush.bf16.msra.mxu0 %v925
    %1097 = vmatpush.bf16.msra.mxu0 %v923
    %1098 = vmatpush.bf16.msra.mxu0 %v921
    %1099 = vmatpush.bf16.msra.mxu0 %v919
    %1100 = vmatpush.bf16.msra.mxu0 %v917
    %1101 = vmatpush.bf16.msra.mxu0 %v915
    %1102 = vmatmul.bf16.gmra.mxu0 %v618
    %v1103 = vpop.f32.mrf.mxu0
    %v1104 = vadd.f32 %v1090, %v1103
    %v1105 = vpop.f32.mrf.mxu0
    %v1106 = vadd.f32 %v1092, %v1105
    %1107 = vdwg.mxu0
    %1108 = vmatpush.bf16.msra.mxu0 %v945
    %1109 = vmatpush.bf16.msra.mxu0 %v943
    %1110 = vmatpush.bf16.msra.mxu0 %v941
    %1111 = vmatpush.bf16.msra.mxu0 %v939
    %1112 = vmatpush.bf16.msra.mxu0 %v937
    %1113 = vmatpush.bf16.msra.mxu0 %v935
    %1114 = vmatpush.bf16.msra.mxu0 %v933
    %1115 = vmatpush.bf16.msra.mxu0 %v931
    %1116 = vmatmul.bf16.gmra.mxu0 %v619
    %v1117 = vpop.f32.mrf.mxu0
    %v1118 = vadd.f32 %v1104, %v1117
    %v1119 = vpop.f32.mrf.mxu0
    %v1120 = vadd.f32 %v1106, %v1119
    %1121 = vdwg.mxu0
    %1122 = vst [vmem:[#allocation10] sm:$0xff] %v1062
    %1123 = vst [vmem:[#allocation10 + $0x8] sm:$0xff] %v1118
    %1124 = vst [vmem:[#allocation10 + $0x10] sm:$0xff] %v1064
    %1125 = vst [vmem:[#allocation10 + $0x18] sm:$0xff] %v1120
    // Predicated region
    $region38: #{tpu_custom_call.1} parent=1 // pred_check
      _
    $region39: #{tpu_custom_call.1} parent=1 // pred_check_branch
      %1127 = sbr.rel (0) target = $region41
    $region40: #{tpu_custom_call.1} parent=1 // pred_region
      %1129 = vsyncadd [#allocation4], 0
      %s1130 = sshll.u32 [#allocation10], 4
      %s1131 = int_to_ptr.vmem [resolvable:$true] %s1130
      %s1132 = sshll.u32 %s5, 4
      %s1133 = int_to_ptr.hbm [resolvable:$true] %s1132
      %1138 = dma.vmem_to_hbm [thread:$0]  %s1131, 512, %s1133, [#allocation4], 256, 256, 16
    $region41: #{tpu_custom_call.1} parent=1 // pred_fallthru
      _
    // Predicated region
    $region42: #{tpu_custom_call.1} parent=1 // pred_check
      _
    $region43: #{tpu_custom_call.1} parent=1 // pred_check_branch
      %1140 = sbr.rel (0) target = $region45
    $region44: #{tpu_custom_call.1} parent=1 // pred_region
      %1142 = dma.done [#allocation4], 512
    $region45: #{tpu_custom_call.1} parent=1 // pred_fallthru
      _
    %1143 = vsyncpa [#allocation3], 1
    %1144 = vsyncpa [#allocation6], 1
    %1145 = vsyncpa [#allocation9], 1
    %1146 = vsyncpa [#allocation4], 1

</llo_original>
